<compile_context>
chip_gen: v7x
topology: tpu7x:2x2x1
jax: 0.10.0
libtpu: 0.0.40
codegen_flags: <defaults>
</compile_context>

<pallas_src>
import functools

import jax
import jax.numpy as jnp
from jax import lax
from jax.experimental import pallas as pl
from jax.experimental.pallas import tpu as pltpu

HIDDEN_DIM = 32
LANES = 128          # vreg lane width
LN_EPS = 1e-5        # torch.nn.LayerNorm default


def _policy_kernel(x_ref, mats_ref, pvec_ref, o_ref):
    # x_ref:    (tm_p, 128)  -- `pack` logical rows of width H packed per row
    # mats_ref: (256, 128)   -- rows [:128] = blockdiag W1, rows [128:] = group-avg
    # pvec_ref: (8, 128)     -- rows [:pack] = w2 selector, then gamma, beta, b1
    # o_ref:    (pack, tm_p) -- o[g, r] = logit of logical row pack*r + g
    pack = o_ref.shape[0]
    lanes = x_ref.shape[-1]

    x = x_ref[...].astype(jnp.float32)
    w1bd = mats_ref[:lanes, :].astype(jnp.float32)     # (128, 128)
    avg = mats_ref[lanes:, :].astype(jnp.float32)      # (128, 128)
    w2sel = pvec_ref[:pack, :].astype(jnp.float32)     # (pack, 128)
    gamma = pvec_ref[pack:pack + 1, :].astype(jnp.float32)
    beta = pvec_ref[pack + 1:pack + 2, :].astype(jnp.float32)
    b1 = pvec_ref[pack + 2:pack + 3, :].astype(jnp.float32)

    # LayerNorm per 32-lane group; mean / biased var via the (idle) MXU.
    # avg = kron(I_pack, ones(H,H)/H) broadcasts each group's mean across its
    # own 32 lanes, so no further broadcast is needed.
    mean = jnp.dot(x, avg, preferred_element_type=jnp.float32)
    c = x - mean
    var = jnp.dot(c * c, avg, preferred_element_type=jnp.float32)
    y = c * lax.rsqrt(var + LN_EPS) * gamma + beta

    # Linear(H,H) + bias + ReLU: one block-diagonal 128x128 MXU matmul.
    h = jnp.dot(y, w1bd, preferred_element_type=jnp.float32)
    h = jnp.maximum(h + b1, 0.0)

    # Linear(H,1): contract each 32-lane group against w2 on the MXU; the
    # (pack, tm_p) result is produced directly lane-dense for the store.
    logits = jnp.einsum("gk,rk->gr", w2sel, h,
                        preferred_element_type=jnp.float32)
    o_ref[...] = logits.astype(o_ref.dtype)


def _round_up(x, m):
    return -(-x // m) * m


def _pick_tile(n4, tm_p_req):
    """Choose (packed rows per block, grid size).

    Tiny inputs get one exact block.  Otherwise blocks are multiples of 128
    packed rows, capped at tm_p_req, sized so the grid is even (>=2) whenever
    possible to balance v7x's two TensorCores (harmless on v5e/v6e).
    """
    tm_p_max = max(128, _round_up(int(tm_p_req), 128))
    if n4 <= 128:
        return n4, 1
    grid = max(2, pl.cdiv(n4, tm_p_max))
    if grid % 2:
        grid += 1
    tm_p = min(tm_p_max, _round_up(pl.cdiv(n4, grid), 128))
    # Nudge the tile down so the final grid stays even when the 128-rounding
    # collapsed a block (pure perf nicety; any value here is correct).
    while tm_p > 128 and pl.cdiv(n4, tm_p) % 2:
        tm_p -= 128
    return tm_p, pl.cdiv(n4, tm_p)


def _pack_params(params, h_dim, pack):
    f32 = jnp.float32
    w1 = params["w1"].astype(f32)                              # (H, H), used as y @ w1
    gamma = params["ln_gamma"].astype(f32).reshape(1, h_dim)
    beta = params["ln_beta"].astype(f32).reshape(1, h_dim)
    b1 = params["b1"].astype(f32).reshape(1, h_dim)
    w2 = params["w2"].astype(f32).reshape(1, h_dim)            # (1, H)

    eye = jnp.eye(pack, dtype=f32)
    w1bd = jnp.kron(eye, w1)                                   # (128, 128)
    avg = jnp.kron(eye, jnp.full((h_dim, h_dim), 1.0 / h_dim, f32))
    mats = jnp.concatenate([w1bd, avg], axis=0)                # (256, 128)

    w2sel = jnp.kron(eye, w2)                                  # (pack, 128)
    tiled = lambda v: jnp.tile(v, (1, pack))                   # (1, 128)
    pvec = jnp.concatenate([w2sel, tiled(gamma), tiled(beta), tiled(b1)], axis=0)
    pad = (-pvec.shape[0]) % 8
    if pad:
        pvec = jnp.concatenate(
            [pvec, jnp.zeros((pad, pack * h_dim), f32)], axis=0)  # (8, 128)
    return mats, pvec


@functools.partial(jax.jit, static_argnames=("tm",))
def policy_forward(h_val, params, *, tm=4096):
    """h_val: (..., H) -> logits (..., 1)."""
    h_dim = h_val.shape[-1]
    assert LANES % h_dim == 0, (
        f"packed kernel expects hidden_dim dividing {LANES}, got {h_dim}")
    pack = LANES // h_dim
    lead = h_val.shape[:-1]
    x = h_val.reshape(-1, h_dim)
    n = x.shape[0]

    # Pack `pack` logical rows per 128-lane packed row.  Only when n is not a
    # multiple of `pack` (rare) do we append < pack zero rows.
    rem = (-n) % pack
    if rem:
        x = jnp.concatenate([x, jnp.zeros((rem, h_dim), x.dtype)], axis=0)
    n4 = (n + rem) // pack
    xp = x.reshape(n4, LANES)

    tm_p, grid = _pick_tile(n4, max(1, tm // pack))
    n4_out = grid * tm_p          # padded *allocation* only; no input pad/copy

    mats, pvec = _pack_params(params, h_dim, pack)

    flops = n4 * (3 * 2 * LANES * LANES + 2 * pack * LANES + 12 * LANES)
    bytes_accessed = ((n4 * LANES + pack * n4_out) * h_val.dtype.itemsize
                      + (mats.size + pvec.size) * 4)

    out = pl.pallas_call(
        _policy_kernel,
        out_shape=jax.ShapeDtypeStruct((pack, n4_out), h_val.dtype),
        grid_spec=pltpu.PrefetchScalarGridSpec(
            num_scalar_prefetch=0,
            grid=(grid,),
            in_specs=[
                pl.BlockSpec((tm_p, LANES), lambda i: (i, 0)),           # packed x rows
                pl.BlockSpec((2 * LANES, LANES), lambda i: (0, 0)),      # W1bd | avg
                pl.BlockSpec((pvec.shape[0], LANES), lambda i: (0, 0)),  # w2sel/gamma/beta/b1
            ],
            out_specs=pl.BlockSpec((pack, tm_p), lambda i: (0, i)),
        ),
        compiler_params=pltpu.CompilerParams(
            dimension_semantics=("parallel",)),
        cost_estimate=pl.CostEstimate(
            flops=int(flops),
            transcendentals=int(n4 * LANES),
            bytes_accessed=int(bytes_accessed)),
    )(xp, mats, pvec)

    # out[g, r] = logit(pack*r + g); tiny transpose/reshape in the wrapper.
    logits = out.T.reshape(-1)[:n]
    return logits.reshape(*lead, 1)


def init_params(key, hidden_dim):
    k1, k2, k3, _ = jax.random.split(key, 4)
    bound1 = 1.0 / jnp.sqrt(hidden_dim)
    return {
        "ln_gamma": jnp.ones((hidden_dim,), jnp.float32),
        "ln_beta": jnp.zeros((hidden_dim,), jnp.float32),
        "w1": jax.random.uniform(k1, (hidden_dim, hidden_dim), jnp.float32,
                                 -bound1, bound1),
        "b1": jax.random.uniform(k2, (hidden_dim,), jnp.float32,
                                 -bound1, bound1),
        "w2": jax.random.uniform(k3, (hidden_dim, 1), jnp.float32,
                                 -bound1, bound1),
    }


def _reference(h_val, params):
    x = h_val.astype(jnp.float32)
    mean = jnp.mean(x, axis=-1, keepdims=True)
    var = jnp.mean((x - mean) ** 2, axis=-1, keepdims=True)
    xn = (x - mean) * lax.rsqrt(var + LN_EPS)
    y = xn * params["ln_gamma"] + params["ln_beta"]
    h = jnp.maximum(y @ params["w1"] + params["b1"], 0.0)
    return (h @ params["w2"]).astype(h_val.dtype)


if __name__ == "__main__":
    key = jax.random.PRNGKey(0)
    kp, kx1, kx2 = jax.random.split(key, 3)
    B, S, H = 2, 8, HIDDEN_DIM

    params = init_params(kp, H)

    # Small shape consistent with the module (single tiny block path).
    h_small = jax.random.normal(kx1, (B, S, H), jnp.float32)
    logits_small = policy_forward(h_small, params)
    jax.block_until_ready(logits_small)
    ref_small = _reference(h_small, params)
    assert logits_small.shape == (B, S, 1), logits_small.shape
    assert jnp.allclose(logits_small, ref_small, atol=1e-4, rtol=1e-4), (
        float(jnp.max(jnp.abs(logits_small - ref_small))))

    # Larger row count: multi-block even grid + a partial trailing x block
    # (no wrapper-side padding of the input).
    h_big = jax.random.normal(kx2, (4, 700, H), jnp.float32)   # 2800 rows
    logits_big = policy_forward(h_big, params)
    jax.block_until_ready(logits_big)
    ref_big = _reference(h_big, params)
    assert logits_big.shape == (4, 700, 1), logits_big.shape
    assert jnp.allclose(logits_big, ref_big, atol=1e-4, rtol=1e-4), (
        float(jnp.max(jnp.abs(logits_big - ref_big))))

    print("KERNEL_OK")
</pallas_src>

<mosaic_0001>
module attributes {stable_mosaic.version = 11 : i64} {
  func.func @_policy_kernel(%arg0: i32, %arg1: memref<4x128xf32, #tpu.memory_space<vmem>>, %arg2: memref<256x128xf32, #tpu.memory_space<vmem>>, %arg3: memref<8x128xf32, #tpu.memory_space<vmem>>, %arg4: memref<4x4xf32, #tpu.memory_space<vmem>>) attributes {dimension_semantics = [#tpu.dimension_semantics<parallel>], iteration_bounds = array<i64: 1>, scalar_prefetch = 0 : i64, scratch_operands = 0 : i64, tpu.core_type = #tpu.core_type<tc>, window_params = [{transform_indices = @transform_0, window_bounds = array<i64: 4, 128>}, {pipeline_mode = #tpu.pipeline_mode<synchronous>, transform_indices = @transform_1, window_bounds = array<i64: 256, 128>}, {pipeline_mode = #tpu.pipeline_mode<synchronous>, transform_indices = @transform_2, window_bounds = array<i64: 8, 128>}, {transform_indices = @transform_3, window_bounds = array<i64: 4, 4>}]} {
    %c0 = arith.constant 0 : index
    %c0_0 = arith.constant 0 : index
    %0 = vector.load %arg1[%c0, %c0_0] : memref<4x128xf32, #tpu.memory_space<vmem>>, vector<4x128xf32>
    %c0_1 = arith.constant 0 : index
    %c0_2 = arith.constant 0 : index
    %1 = vector.load %arg2[%c0_1, %c0_2] : memref<256x128xf32, #tpu.memory_space<vmem>>, vector<128x128xf32>
    %c128 = arith.constant 128 : index
    %c0_3 = arith.constant 0 : index
    %2 = vector.load %arg2[%c128, %c0_3] : memref<256x128xf32, #tpu.memory_space<vmem>>, vector<128x128xf32>
    %c0_4 = arith.constant 0 : index
    %c0_5 = arith.constant 0 : index
    %3 = vector.load %arg3[%c0_4, %c0_5] : memref<8x128xf32, #tpu.memory_space<vmem>>, vector<4x128xf32>
    %c4 = arith.constant 4 : index
    %c0_6 = arith.constant 0 : index
    %4 = vector.load %arg3[%c4, %c0_6] : memref<8x128xf32, #tpu.memory_space<vmem>>, vector<1x128xf32>
    %c5 = arith.constant 5 : index
    %c0_7 = arith.constant 0 : index
    %5 = vector.load %arg3[%c5, %c0_7] : memref<8x128xf32, #tpu.memory_space<vmem>>, vector<1x128xf32>
    %c6 = arith.constant 6 : index
    %c0_8 = arith.constant 0 : index
    %6 = vector.load %arg3[%c6, %c0_8] : memref<8x128xf32, #tpu.memory_space<vmem>>, vector<1x128xf32>
    %cst = arith.constant dense<0.000000e+00> : vector<4x128xf32>
    %7 = tpu.matmul %0, %2, %cst {dimension_numbers = #tpu.dot_dimension_numbers<[1], [0], [0], [1], [0, 0, 1, 1], [], []>} : vector<4x128xf32>, vector<128x128xf32>, vector<4x128xf32> -> vector<4x128xf32>
    %8 = arith.subf %0, %7 : vector<4x128xf32>
    %9 = arith.mulf %8, %8 : vector<4x128xf32>
    %cst_9 = arith.constant dense<0.000000e+00> : vector<4x128xf32>
    %10 = tpu.matmul %9, %2, %cst_9 {dimension_numbers = #tpu.dot_dimension_numbers<[1], [0], [0], [1], [0, 0, 1, 1], [], []>} : vector<4x128xf32>, vector<128x128xf32>, vector<4x128xf32> -> vector<4x128xf32>
    %cst_10 = arith.constant 9.99999974E-6 : f32
    %11 = vector.broadcast %cst_10 : f32 to vector<4x128xf32>
    %12 = arith.addf %10, %11 : vector<4x128xf32>
    %13 = math.rsqrt %12 : vector<4x128xf32>
    %14 = arith.mulf %8, %13 : vector<4x128xf32>
    %15 = vector.broadcast %4 : vector<1x128xf32> to vector<4x128xf32>
    %16 = arith.mulf %14, %15 : vector<4x128xf32>
    %17 = vector.broadcast %5 : vector<1x128xf32> to vector<4x128xf32>
    %18 = arith.addf %16, %17 : vector<4x128xf32>
    %cst_11 = arith.constant dense<0.000000e+00> : vector<4x128xf32>
    %19 = tpu.matmul %18, %1, %cst_11 {dimension_numbers = #tpu.dot_dimension_numbers<[1], [0], [0], [1], [0, 0, 1, 1], [], []>} : vector<4x128xf32>, vector<128x128xf32>, vector<4x128xf32> -> vector<4x128xf32>
    %20 = vector.broadcast %6 : vector<1x128xf32> to vector<4x128xf32>
    %21 = arith.addf %19, %20 : vector<4x128xf32>
    %cst_12 = arith.constant 0.000000e+00 : f32
    %22 = vector.broadcast %cst_12 : f32 to vector<4x128xf32>
    %23 = arith.maximumf %21, %22 : vector<4x128xf32>
    "tpu.trace_start"() <{level = 10 : i32, message = "gk,rk->gr"}> : () -> ()
    %cst_13 = arith.constant dense<0.000000e+00> : vector<4x4xf32>
    %24 = tpu.matmul %3, %23, %cst_13 {dimension_numbers = #tpu.dot_dimension_numbers<[1], [1], [0], [0], [0, 0, 1, 0], [], []>} : vector<4x128xf32>, vector<4x128xf32>, vector<4x4xf32> -> vector<4x4xf32>
    "tpu.trace_stop"() : () -> ()
    %c0_14 = arith.constant 0 : index
    %c0_15 = arith.constant 0 : index
    %25 = vector.load %arg4[%c0_14, %c0_15] : memref<4x4xf32, #tpu.memory_space<vmem>>, vector<4x4xf32>
    tpu.vector_store %arg4[%c0_14, %c0_15], %24 {strides = array<i32>} : memref<4x4xf32, #tpu.memory_space<vmem>>, vector<4x4xf32>,
    return
  }
  func.func @transform_0(%arg0: i32) -> (i32, i32) {
    %c0_i32 = arith.constant 0 : i32
    %c0_i32_0 = arith.constant 0 : i32
    return %arg0, %c0_i32 : i32, i32
  }
  func.func @transform_1(%arg0: i32) -> (i32, i32) {
    %c0_i32 = arith.constant 0 : i32
    %c0_i32_0 = arith.constant 0 : i32
    %c0_i32_1 = arith.constant 0 : i32
    return %c0_i32, %c0_i32_0 : i32, i32
  }
  func.func @transform_2(%arg0: i32) -> (i32, i32) {
    %c0_i32 = arith.constant 0 : i32
    %c0_i32_0 = arith.constant 0 : i32
    %c0_i32_1 = arith.constant 0 : i32
    return %c0_i32, %c0_i32_0 : i32, i32
  }
  func.func @transform_3(%arg0: i32) -> (i32, i32) {
    %c0_i32 = arith.constant 0 : i32
    %c0_i32_0 = arith.constant 0 : i32
    return %c0_i32, %arg0 : i32, i32
  }
}

</mosaic_0001>

<llo_original>
// kernel: policy_forward.1
$region0: #{policy_forward.1}
  #allocation0 [shape = 'u32[]', space=smem, size = 0x4, offset = 0x4, fixed_abs, tag = 'smem constant byte address 0x4 - core index']
  #allocation1 [shape = 'u32[144,128]{1,0:T(1,128)}', space=vmem, size = 0x12000, scoped, tag = 'internal scratch']
  %s0 = inlined_call_operand.vmem [shape: f32[4,128], index: 0, kind: input, shape index: {}]
  %s1 = inlined_call_operand.vmem [shape: f32[256,128], index: 1, kind: input, shape index: {}]
  %s2 = inlined_call_operand.vmem [shape: f32[8,128], index: 2, kind: input, shape index: {}]
  %s3 = inlined_call_operand.vmem [shape: f32[4,4], index: 3, kind: output, shape index: {}]
  %s4 = sld [smem:[#allocation0]]
  $region22: #{policy_forward.1} parent=0
    _
  %s6 = ssub.s32 1, %s4
  %s7 = scalar_select 0, %s6, %s4
  // Predicated region
  $region2: #{policy_forward.1} parent=0 // pred_check
    _
  $region3: #{policy_forward.1} parent=0 // pred_check_branch
    %9 = sbr.rel (0) target = $region5
  $region4: #{policy_forward.1} parent=0 // pred_region
    _
  $region5: #{policy_forward.1} parent=0 // pred_fallthru
    _
  // Predicated region
  $region6: #{policy_forward.1} parent=0 // pred_check
    _
  $region7: #{policy_forward.1} parent=0 // pred_check_branch
    %11 = sbr.rel (0) target = $region9
  $region8: #{policy_forward.1} parent=0 // pred_region
    _
  $region9: #{policy_forward.1} parent=0 // pred_fallthru
    _
  // Predicated region
  $region10: #{policy_forward.1} parent=0 // pred_check
    _
  $region11: #{policy_forward.1} parent=0 // pred_check_branch
    %13 = sbr.rel (0) target = $region13
  $region12: #{policy_forward.1} parent=0 // pred_region
    _
  $region13: #{policy_forward.1} parent=0 // pred_fallthru
    _
  %v14 = vld [vmem:[%s0] sm:$0xf]
  %v15 = vld [vmem:[%s1] sm:$0xff]
  %v16 = vld [vmem:[%s1 + $0x8] sm:$0xff]
  %v17 = vld [vmem:[%s1 + $0x10] sm:$0xff]
  %v18 = vld [vmem:[%s1 + $0x18] sm:$0xff]
  %v19 = vld [vmem:[%s1 + $0x20] sm:$0xff]
  %v20 = vld [vmem:[%s1 + $0x28] sm:$0xff]
  %v21 = vld [vmem:[%s1 + $0x30] sm:$0xff]
  %v22 = vld [vmem:[%s1 + $0x38] sm:$0xff]
  %v23 = vld [vmem:[%s1 + $0x40] sm:$0xff]
  %v24 = vld [vmem:[%s1 + $0x48] sm:$0xff]
  %v25 = vld [vmem:[%s1 + $0x50] sm:$0xff]
  %v26 = vld [vmem:[%s1 + $0x58] sm:$0xff]
  %v27 = vld [vmem:[%s1 + $0x60] sm:$0xff]
  %v28 = vld [vmem:[%s1 + $0x68] sm:$0xff]
  %v29 = vld [vmem:[%s1 + $0x70] sm:$0xff]
  %v30 = vld [vmem:[%s1 + $0x78] sm:$0xff]
  %v31 = vld [vmem:[%s1 + $0x80] sm:$0xff]
  %v32 = vld [vmem:[%s1 + $0x88] sm:$0xff]
  %v33 = vld [vmem:[%s1 + $0x90] sm:$0xff]
  %v34 = vld [vmem:[%s1 + $0x98] sm:$0xff]
  %v35 = vld [vmem:[%s1 + $0xa0] sm:$0xff]
  %v36 = vld [vmem:[%s1 + $0xa8] sm:$0xff]
  %v37 = vld [vmem:[%s1 + $0xb0] sm:$0xff]
  %v38 = vld [vmem:[%s1 + $0xb8] sm:$0xff]
  %v39 = vld [vmem:[%s1 + $0xc0] sm:$0xff]
  %v40 = vld [vmem:[%s1 + $0xc8] sm:$0xff]
  %v41 = vld [vmem:[%s1 + $0xd0] sm:$0xff]
  %v42 = vld [vmem:[%s1 + $0xd8] sm:$0xff]
  %v43 = vld [vmem:[%s1 + $0xe0] sm:$0xff]
  %v44 = vld [vmem:[%s1 + $0xe8] sm:$0xff]
  %v45 = vld [vmem:[%s1 + $0xf0] sm:$0xff]
  %v46 = vld [vmem:[%s1 + $0xf8] sm:$0xff]
  %v47 = vld [vmem:[%s2] sm:$0xf]
  %v48 = vld [vmem:[%s2 + $0x4] sm:$0x1]
  %v49 = vld [vmem:[%s2 + $0x5] sm:$0x1]
  %v50 = vld [vmem:[%s2 + $0x6] sm:$0x1]
  %51 = vmatprep.subr.mxu0 0.0
  %52 = vmatpush1.msra.mxu0 %v31
  %53 = vmatprep.subr.mxu0 0.0
  %54 = vmatpush1.msra.mxu0 %v32
  %55 = vmatprep.subr.mxu0 0.0
  %56 = vmatpush1.msra.mxu0 %v33
  %57 = vmatprep.subr.mxu0 0.0
  %58 = vmatpush1.msra.mxu0 %v34
  %59 = vmatprep.subr.mxu0 0.0
  %60 = vmatpush1.msra.mxu0 %v35
  %61 = vmatprep.subr.mxu0 0.0
  %62 = vmatpush1.msra.mxu0 %v36
  %63 = vmatprep.subr.mxu0 0.0
  %64 = vmatpush1.msra.mxu0 %v37
  %65 = vmatprep.subr.mxu0 0.0
  %66 = vmatpush1.msra.mxu0 %v38
  %67 = vmatprep.subr.mxu0 0.0
  %68 = vmatpush1.msra.mxu0 %v39
  %69 = vmatprep.subr.mxu0 0.0
  %70 = vmatpush1.msra.mxu0 %v40
  %71 = vmatprep.subr.mxu0 0.0
  %72 = vmatpush1.msra.mxu0 %v41
  %73 = vmatprep.subr.mxu0 0.0
  %74 = vmatpush1.msra.mxu0 %v42
  %75 = vmatprep.subr.mxu0 0.0
  %76 = vmatpush1.msra.mxu0 %v43
  %77 = vmatprep.subr.mxu0 0.0
  %78 = vmatpush1.msra.mxu0 %v44
  %79 = vmatprep.subr.mxu0 0.0
  %80 = vmatpush1.msra.mxu0 %v45
  %81 = vmatprep.subr.mxu0 0.0
  %82 = vmatpush1.msra.mxu0 %v46
  %83 = vmatprep.subr.mxu0 0.0
  %84 = vmatpush1.msra.mxu0 0.0
  %85 = vmatprep.subr.mxu0 0.0
  %86 = vmatpush1.msra.mxu0 0.0
  %87 = vmatprep.subr.mxu0 0.0
  %88 = vmatpush1.msra.mxu0 0.0
  %89 = vmatprep.subr.mxu0 0.0
  %90 = vmatpush1.msra.mxu0 0.0
  %91 = vmatprep.subr.mxu0 0.0
  %92 = vmatpush1.msra.mxu0 0.0
  %93 = vmatprep.subr.mxu0 0.0
  %94 = vmatpush1.msra.mxu0 0.0
  %95 = vmatprep.subr.mxu0 0.0
  %96 = vmatpush1.msra.mxu0 0.0
  %97 = vmatprep.subr.mxu0 0.0
  %98 = vmatpush1.msra.mxu0 0.0
  %99 = vmatprep.subr.mxu0 0.0
  %100 = vmatpush1.msra.mxu0 0.0
  %101 = vmatprep.subr.mxu0 0.0
  %102 = vmatpush1.msra.mxu0 0.0
  %103 = vmatprep.subr.mxu0 0.0
  %104 = vmatpush1.msra.mxu0 0.0
  %105 = vmatprep.subr.mxu0 0.0
  %106 = vmatpush1.msra.mxu0 0.0
  %107 = vmatprep.subr.mxu0 0.0
  %108 = vmatpush1.msra.mxu0 0.0
  %109 = vmatprep.subr.mxu0 0.0
  %110 = vmatpush1.msra.mxu0 0.0
  %111 = vmatprep.subr.mxu0 0.0
  %112 = vmatpush1.msra.mxu0 0.0
  %113 = vmatprep.subr.mxu0 0.0
  %114 = vmatpush1.msra.mxu0 0.0
  %115 = vmatprep.mubr.f32.mxu0 0.0
  %116 = vmatmul.mubr.f32.gmra.mrb[0].mxu0 %v14
  %v117 = vpop.f32.mrb[0].mxu0
  %v118 = vadd.f32 0.0, %v117
  %v119 = vpop.f32.mrb[0].mxu0
  %120 = vdwg.mxu0
  %v121 = vsub.f32 %v14, %v118
  %v122 = vmul.f32 %v121, %v121
  %123 = vmatprep.subr.mxu0 0.0
  %124 = vmatpush1.msra.mxu0 %v31
  %125 = vmatprep.subr.mxu0 0.0
  %126 = vmatpush1.msra.mxu0 %v32
  %127 = vmatprep.subr.mxu0 0.0
  %128 = vmatpush1.msra.mxu0 %v33
  %129 = vmatprep.subr.mxu0 0.0
  %130 = vmatpush1.msra.mxu0 %v34
  %131 = vmatprep.subr.mxu0 0.0
  %132 = vmatpush1.msra.mxu0 %v35
  %133 = vmatprep.subr.mxu0 0.0
  %134 = vmatpush1.msra.mxu0 %v36
  %135 = vmatprep.subr.mxu0 0.0
  %136 = vmatpush1.msra.mxu0 %v37
  %137 = vmatprep.subr.mxu0 0.0
  %138 = vmatpush1.msra.mxu0 %v38
  %139 = vmatprep.subr.mxu0 0.0
  %140 = vmatpush1.msra.mxu0 %v39
  %141 = vmatprep.subr.mxu0 0.0
  %142 = vmatpush1.msra.mxu0 %v40
  %143 = vmatprep.subr.mxu0 0.0
  %144 = vmatpush1.msra.mxu0 %v41
  %145 = vmatprep.subr.mxu0 0.0
  %146 = vmatpush1.msra.mxu0 %v42
  %147 = vmatprep.subr.mxu0 0.0
  %148 = vmatpush1.msra.mxu0 %v43
  %149 = vmatprep.subr.mxu0 0.0
  %150 = vmatpush1.msra.mxu0 %v44
  %151 = vmatprep.subr.mxu0 0.0
  %152 = vmatpush1.msra.mxu0 %v45
  %153 = vmatprep.subr.mxu0 0.0
  %154 = vmatpush1.msra.mxu0 %v46
  %155 = vmatprep.subr.mxu0 0.0
  %156 = vmatpush1.msra.mxu0 0.0
  %157 = vmatprep.subr.mxu0 0.0
  %158 = vmatpush1.msra.mxu0 0.0
  %159 = vmatprep.subr.mxu0 0.0
  %160 = vmatpush1.msra.mxu0 0.0
  %161 = vmatprep.subr.mxu0 0.0
  %162 = vmatpush1.msra.mxu0 0.0
  %163 = vmatprep.subr.mxu0 0.0
  %164 = vmatpush1.msra.mxu0 0.0
  %165 = vmatprep.subr.mxu0 0.0
  %166 = vmatpush1.msra.mxu0 0.0
  %167 = vmatprep.subr.mxu0 0.0
  %168 = vmatpush1.msra.mxu0 0.0
  %169 = vmatprep.subr.mxu0 0.0
  %170 = vmatpush1.msra.mxu0 0.0
  %171 = vmatprep.subr.mxu0 0.0
  %172 = vmatpush1.msra.mxu0 0.0
  %173 = vmatprep.subr.mxu0 0.0
  %174 = vmatpush1.msra.mxu0 0.0
  %175 = vmatprep.subr.mxu0 0.0
  %176 = vmatpush1.msra.mxu0 0.0
  %177 = vmatprep.subr.mxu0 0.0
  %178 = vmatpush1.msra.mxu0 0.0
  %179 = vmatprep.subr.mxu0 0.0
  %180 = vmatpush1.msra.mxu0 0.0
  %181 = vmatprep.subr.mxu0 0.0
  %182 = vmatpush1.msra.mxu0 0.0
  %183 = vmatprep.subr.mxu0 0.0
  %184 = vmatpush1.msra.mxu0 0.0
  %185 = vmatprep.subr.mxu0 0.0
  %186 = vmatpush1.msra.mxu0 0.0
  %187 = vmatprep.mubr.f32.mxu0 0.0
  %188 = vmatmul.mubr.f32.gmra.mrb[0].mxu0 %v122
  %v189 = vpop.f32.mrb[0].mxu0
  %v190 = vadd.f32 1e-05, %v189
  %v191 = vpop.f32.mrb[0].mxu0
  %192 = vdwg.mxu0
  %v193 = vrsqrt.pop %v190
  %v194 = vmul.f32 %v121, %v193
  %v195 = vlaneseq
  %v196 = vshrl.u32 %v195, 7
  %v197 = vsub.s32 0, %v196
  %v198 = vrot.slane %v48, %v197
  %v199 = vmul.f32 %v194, %v198
  %v200 = vlaneseq
  %v201 = vshrl.u32 %v200, 7
  %v202 = vsub.s32 0, %v201
  %v203 = vrot.slane %v49, %v202
  %v204 = vadd.f32 %v199, %v203
  %v205 = vlaneseq
  %v206 = vshrl.u32 %v205, 7
  %v207 = vsub.s32 0, %v206
  %v208 = vrot.slane %v50, %v207
  %209 = vmatprep.subr.mxu0 0.0
  %210 = vmatpush1.msra.mxu0 %v15
  %211 = vmatprep.subr.mxu0 0.0
  %212 = vmatpush1.msra.mxu0 %v16
  %213 = vmatprep.subr.mxu0 0.0
  %214 = vmatpush1.msra.mxu0 %v17
  %215 = vmatprep.subr.mxu0 0.0
  %216 = vmatpush1.msra.mxu0 %v18
  %217 = vmatprep.subr.mxu0 0.0
  %218 = vmatpush1.msra.mxu0 %v19
  %219 = vmatprep.subr.mxu0 0.0
  %220 = vmatpush1.msra.mxu0 %v20
  %221 = vmatprep.subr.mxu0 0.0
  %222 = vmatpush1.msra.mxu0 %v21
  %223 = vmatprep.subr.mxu0 0.0
  %224 = vmatpush1.msra.mxu0 %v22
  %225 = vmatprep.subr.mxu0 0.0
  %226 = vmatpush1.msra.mxu0 %v23
  %227 = vmatprep.subr.mxu0 0.0
  %228 = vmatpush1.msra.mxu0 %v24
  %229 = vmatprep.subr.mxu0 0.0
  %230 = vmatpush1.msra.mxu0 %v25
  %231 = vmatprep.subr.mxu0 0.0
  %232 = vmatpush1.msra.mxu0 %v26
  %233 = vmatprep.subr.mxu0 0.0
  %234 = vmatpush1.msra.mxu0 %v27
  %235 = vmatprep.subr.mxu0 0.0
  %236 = vmatpush1.msra.mxu0 %v28
  %237 = vmatprep.subr.mxu0 0.0
  %238 = vmatpush1.msra.mxu0 %v29
  %239 = vmatprep.subr.mxu0 0.0
  %240 = vmatpush1.msra.mxu0 %v30
  %241 = vmatprep.subr.mxu0 0.0
  %242 = vmatpush1.msra.mxu0 0.0
  %243 = vmatprep.subr.mxu0 0.0
  %244 = vmatpush1.msra.mxu0 0.0
  %245 = vmatprep.subr.mxu0 0.0
  %246 = vmatpush1.msra.mxu0 0.0
  %247 = vmatprep.subr.mxu0 0.0
  %248 = vmatpush1.msra.mxu0 0.0
  %249 = vmatprep.subr.mxu0 0.0
  %250 = vmatpush1.msra.mxu0 0.0
  %251 = vmatprep.subr.mxu0 0.0
  %252 = vmatpush1.msra.mxu0 0.0
  %253 = vmatprep.subr.mxu0 0.0
  %254 = vmatpush1.msra.mxu0 0.0
  %255 = vmatprep.subr.mxu0 0.0
  %256 = vmatpush1.msra.mxu0 0.0
  %257 = vmatprep.subr.mxu0 0.0
  %258 = vmatpush1.msra.mxu0 0.0
  %259 = vmatprep.subr.mxu0 0.0
  %260 = vmatpush1.msra.mxu0 0.0
  %261 = vmatprep.subr.mxu0 0.0
  %262 = vmatpush1.msra.mxu0 0.0
  %263 = vmatprep.subr.mxu0 0.0
  %264 = vmatpush1.msra.mxu0 0.0
  %265 = vmatprep.subr.mxu0 0.0
  %266 = vmatpush1.msra.mxu0 0.0
  %267 = vmatprep.subr.mxu0 0.0
  %268 = vmatpush1.msra.mxu0 0.0
  %269 = vmatprep.subr.mxu0 0.0
  %270 = vmatpush1.msra.mxu0 0.0
  %271 = vmatprep.subr.mxu0 0.0
  %272 = vmatpush1.msra.mxu0 0.0
  %273 = vmatprep.mubr.f32.mxu0 0.0
  %274 = vmatmul.mubr.f32.gmra.mrb[0].mxu0 %v204
  %v275 = vpop.f32.mrb[0].mxu0
  %v276 = vadd.f32 %v208, %v275
  %v277 = vpop.f32.mrb[0].mxu0
  %278 = vdwg.mxu0
  %v279 = vmax.f32 %v276, 0.0
  %280 = vmatprep.subr.mxu0 0.0
  %281 = vmatpush1.xpose.msra.mxu0 %v279
  %282 = vmatprep.subr.mxu0 0.0
  %283 = vmatpush1.xpose.msra.mxu0 0.0
  %284 = vmatprep.subr.mxu0 0.0
  %285 = vmatpush1.xpose.msra.mxu0 0.0
  %286 = vmatprep.subr.mxu0 0.0
  %287 = vmatpush1.xpose.msra.mxu0 0.0
  %288 = vmatprep.subr.mxu0 0.0
  %289 = vmatpush1.xpose.msra.mxu0 0.0
  %290 = vmatprep.subr.mxu0 0.0
  %291 = vmatpush1.xpose.msra.mxu0 0.0
  %292 = vmatprep.subr.mxu0 0.0
  %293 = vmatpush1.xpose.msra.mxu0 0.0
  %294 = vmatprep.subr.mxu0 0.0
  %295 = vmatpush1.xpose.msra.mxu0 0.0
  %296 = vmatprep.subr.mxu0 0.0
  %297 = vmatpush1.xpose.msra.mxu0 0.0
  %298 = vmatprep.subr.mxu0 0.0
  %299 = vmatpush1.xpose.msra.mxu0 0.0
  %300 = vmatprep.subr.mxu0 0.0
  %301 = vmatpush1.xpose.msra.mxu0 0.0
  %302 = vmatprep.subr.mxu0 0.0
  %303 = vmatpush1.xpose.msra.mxu0 0.0
  %304 = vmatprep.subr.mxu0 0.0
  %305 = vmatpush1.xpose.msra.mxu0 0.0
  %306 = vmatprep.subr.mxu0 0.0
  %307 = vmatpush1.xpose.msra.mxu0 0.0
  %308 = vmatprep.subr.mxu0 0.0
  %309 = vmatpush1.xpose.msra.mxu0 0.0
  %310 = vmatprep.subr.mxu0 0.0
  %311 = vmatpush1.xpose.msra.mxu0 0.0
  %312 = vmatprep.subr.mxu0 0.0
  %313 = vmatpush1.xpose.msra.mxu0 0.0
  %314 = vmatprep.subr.mxu0 0.0
  %315 = vmatpush1.xpose.msra.mxu0 0.0
  %316 = vmatprep.subr.mxu0 0.0
  %317 = vmatpush1.xpose.msra.mxu0 0.0
  %318 = vmatprep.subr.mxu0 0.0
  %319 = vmatpush1.xpose.msra.mxu0 0.0
  %320 = vmatprep.subr.mxu0 0.0
  %321 = vmatpush1.xpose.msra.mxu0 0.0
  %322 = vmatprep.subr.mxu0 0.0
  %323 = vmatpush1.xpose.msra.mxu0 0.0
  %324 = vmatprep.subr.mxu0 0.0
  %325 = vmatpush1.xpose.msra.mxu0 0.0
  %326 = vmatprep.subr.mxu0 0.0
  %327 = vmatpush1.xpose.msra.mxu0 0.0
  %328 = vmatprep.subr.mxu0 0.0
  %329 = vmatpush1.xpose.msra.mxu0 0.0
  %330 = vmatprep.subr.mxu0 0.0
  %331 = vmatpush1.xpose.msra.mxu0 0.0
  %332 = vmatprep.subr.mxu0 0.0
  %333 = vmatpush1.xpose.msra.mxu0 0.0
  %334 = vmatprep.subr.mxu0 0.0
  %335 = vmatpush1.xpose.msra.mxu0 0.0
  %336 = vmatprep.subr.mxu0 0.0
  %337 = vmatpush1.xpose.msra.mxu0 0.0
  %338 = vmatprep.subr.mxu0 0.0
  %339 = vmatpush1.xpose.msra.mxu0 0.0
  %340 = vmatprep.subr.mxu0 0.0
  %341 = vmatpush1.xpose.msra.mxu0 0.0
  %342 = vmatprep.subr.mxu0 0.0
  %343 = vmatpush1.xpose.msra.mxu0 0.0
  %344 = vmatprep.mubr.f32.mxu0 0.0
  %345 = vmatmul.mubr.f32.gmra.mrb[0].mxu0 %v47
  %v346 = vpop.f32.mrb[0].mxu0
  %v347 = vadd.f32 0.0, %v346
  %v348 = vpop.f32.mrb[0].mxu0
  %349 = vdwg.mxu0
  %vm350 = vcmask 27648
  %351 = vst.msk [vmem:[%s3] sm:$0xf] %vm350, %v347
  // Predicated region
  $region14: #{policy_forward.1} parent=0 // pred_check
    _
  $region15: #{policy_forward.1} parent=0 // pred_check_branch
    %353 = sbr.rel (0) target = $region17
  $region16: #{policy_forward.1} parent=0 // pred_region
    _
  $region17: #{policy_forward.1} parent=0 // pred_fallthru
    _
  // Predicated region
  $region18: #{policy_forward.1} parent=0 // pred_check
    _
  $region19: #{policy_forward.1} parent=0 // pred_check_branch
    %355 = sbr.rel (0) target = $region21
  $region20: #{policy_forward.1} parent=0 // pred_region
    _
  $region21: #{policy_forward.1} parent=0 // pred_fallthru
    _

</llo_original>
